<compile_context>
chip_gen: v7x
topology: tpu7x:2x2x1
jax: 0.10.0
libtpu: 0.0.40
codegen_flags: <defaults>
</compile_context>

<pallas_src>
import functools
import math

import jax
import jax.numpy as jnp
from jax.experimental import pallas as pl
from jax.experimental.pallas import tpu as pltpu

ALPHA = 0.2          # LeakyReLU negative slope (module's `alpha`)
CONCAT = True        # apply ELU at the end


def _round_up(v, m):
    return (v + m - 1) // m * m


def _gat_kernel(nnz_ref, f_ref, g_ref, adj_ref, haug_ref, out_ref, acc_ref, *,
                out_dim):
    i = pl.program_id(0)
    j = pl.program_id(1)

    @pl.when(j == 0)
    def _():
        acc_ref[...] = jnp.zeros_like(acc_ref)

    # Skip entirely-empty adjacency tiles (block-level sparsity).
    @pl.when(nnz_ref[i, j] != 0)
    def _():
        # s_ij = f_i + g_j : pure VPU broadcast add in the compute dtype
        # (bf16 on v6e/v7x for 2x packed VALU/EUP throughput).
        s = f_ref[...] + g_ref[...]                          # (tm, tn)
        # leakyrelu(s) = max(s, alpha*s) for 0 < alpha < 1  (1 VALU op)
        lrelu = jnp.maximum(s, ALPHA * s)
        # Fold the adjacency mask into the logit: exp(-inf) == 0 on non-edges.
        logit = jnp.where(adj_ref[...] != 0, -lrelu, -jnp.inf)
        e = jnp.exp(logit).astype(jnp.bfloat16)              # (tm, tn) bf16
        # Aggregate. haug has a ones column at lane `out_dim`, so that lane of
        # the accumulator is the row sum (output lanes are padded to 128).
        acc_ref[...] += jnp.dot(e, haug_ref[...],
                                preferred_element_type=jnp.float32)

    @pl.when(j == pl.num_programs(1) - 1)
    def _():
        acc = acc_ref[...]                                   # (tm, lanes) f32
        rowsum = acc[:, out_dim:out_dim + 1]                 # (tm, 1)
        h_prime = acc * pl.reciprocal(rowsum, approx=True)   # lane-dense
        if CONCAT:
            # ELU (alpha = 1, PyTorch default). Runs once per row tile.
            h_prime = jnp.where(h_prime > 0.0, h_prime, jnp.exp(h_prime) - 1.0)
        out_ref[...] = h_prime.astype(out_ref.dtype)


def sp_graph_attention_layer(x, adj, W, a, *, tm=None, tn=None,
                             compute_dtype=jnp.bfloat16):
    """Forward of SpGraphAttentionLayer (eval-mode dropout).

    x: (N, Fin) f32, adj: (N, N) (nonzero => edge), W: (Fin, D) f32,
    a: (1, 2D) f32. Use compute_dtype=jnp.float32 on v5e (no bf16 VPU/EUP).
    """
    N = x.shape[0]
    D = W.shape[1]

    # ---- dense precompute (plain XLA, hoisted out of the kernel) ----
    h = jnp.dot(x, W, preferred_element_type=jnp.float32)             # (N, D)
    # f_i = h_i . a[:, :D], g_j = h_j . a[:, D:] fused into one (N, 2) matmul.
    a12 = jnp.stack([a[0, :D], a[0, D:]], axis=1)                     # (D, 2)
    fg = jnp.dot(h, a12, preferred_element_type=jnp.float32)          # (N, 2)
    f = fg[:, 0:1].astype(compute_dtype)                              # (N, 1)
    g = fg[:, 1].reshape(1, N).astype(compute_dtype)                  # (1, N)

    # ---- tile sizes ----
    n128 = _round_up(N, 128)
    if tm is None:
        # >= 2 row tiles so both v7x TensorCores get work; keep a multiple of
        # 64 (int8 adj sublane tile is 32).
        tm = min(512, max(64, _round_up(n128 // 2, 64)))
    if tn is None:
        # Large reduction (column) tile: amortizes per-grid-step overhead and
        # accumulator RMW; adj tile is only ~0.5 MiB int8 at tm=512, tn=1024,
        # well within the 32 MiB VMEM limit on all generations (incl. v7x).
        tn = min(1024, n128)
    rows_p = _round_up(N, tm)
    cols_p = _round_up(N, tn)
    lanes = _round_up(D + 1, 128)          # lane-dense accumulator / output

    # ---- padded operands ----
    # TODO(synk): if adj is reused across heads/layers/steps, hoist the int8
    # conversion + padding + block-nnz table out of this function.
    adj_i8 = adj if adj.dtype == jnp.int8 else (adj != 0).astype(jnp.int8)
    adj_p = jnp.pad(adj_i8, ((0, rows_p - N), (0, cols_p - N)))
    # Per-(row-block, col-block) nonzero counts for the block-sparsity skip.
    blk_nnz = jnp.sum(adj_p.reshape(rows_p // tm, tm, cols_p // tn, tn),
                      axis=(1, 3), dtype=jnp.int32)

    f_p = jnp.pad(f, ((0, rows_p - N), (0, 0)))
    g_p = jnp.pad(g, ((0, 0), (0, cols_p - N)))

    # h augmented with a ones column (rowsum fold), zero-padded to `lanes`
    # columns and cols_p rows; bf16 for the MXU.
    haug = jnp.zeros((cols_p, lanes), jnp.bfloat16)
    haug = haug.at[:N, :D].set(h.astype(jnp.bfloat16))
    haug = haug.at[:N, D].set(1.0)

    kernel = functools.partial(_gat_kernel, out_dim=D)

    out = pl.pallas_call(
        kernel,
        out_shape=jax.ShapeDtypeStruct((rows_p, lanes), jnp.float32),
        grid_spec=pltpu.PrefetchScalarGridSpec(
            num_scalar_prefetch=1,
            grid=(rows_p // tm, cols_p // tn),
            in_specs=[
                pl.BlockSpec((tm, 1), lambda i, j, nnz: (i, 0)),      # f
                pl.BlockSpec((1, tn), lambda i, j, nnz: (0, j)),      # g
                pl.BlockSpec((tm, tn), lambda i, j, nnz: (i, j)),     # adj i8
                pl.BlockSpec((tn, lanes), lambda i, j, nnz: (j, 0)),  # h_aug
            ],
            out_specs=pl.BlockSpec((tm, lanes), lambda i, j, nnz: (i, 0)),
            scratch_shapes=[pltpu.VMEM((tm, lanes), jnp.float32)],
        ),
        compiler_params=pltpu.CompilerParams(
            dimension_semantics=("parallel", "arbitrary"),
            vmem_limit_bytes=32 * 1024 * 1024),
    )(blk_nnz, f_p, g_p, adj_p, haug)

    return out[:N, :D]


def _reference(x, adj, W, a):
    """Pure-JAX f32 dense reference of the PyTorch forward (eval-mode dropout)."""
    D = W.shape[1]
    h = x @ W
    f = h @ a[0, :D]
    g = h @ a[0, D:]
    s = f[:, None] + g[None, :]
    e = jnp.exp(-jnp.where(s >= 0, s, ALPHA * s))
    e = jnp.where(adj != 0, e, 0.0)
    rowsum = e.sum(axis=1, keepdims=True)
    h_prime = (e @ h) / rowsum
    if CONCAT:
        h_prime = jnp.where(h_prime > 0, h_prime, jnp.exp(h_prime) - 1.0)
    return h_prime


if __name__ == "__main__":
    key = jax.random.PRNGKey(0)
    k_x, k_adj, k_w, k_a = jax.random.split(key, 4)

    N, in_features, out_features = 128, 64, 32

    # Deterministic inputs; self-loops so no zero rowsum (matches PyTorch NaN
    # behaviour otherwise).
    x = jax.random.normal(k_x, (N, in_features), dtype=jnp.float32)
    adj = (jax.random.uniform(k_adj, (N, N)) < 0.15).astype(jnp.float32)
    adj = jnp.maximum(adj, jnp.eye(N, dtype=jnp.float32))

    # Xavier-normal-style deterministic parameter init (gain=1.414).
    gain = 1.414
    w_std = gain * math.sqrt(2.0 / (in_features + out_features))
    a_std = gain * math.sqrt(2.0 / (1 + 2 * out_features))
    W = w_std * jax.random.normal(k_w, (in_features, out_features), jnp.float32)
    a = a_std * jax.random.normal(k_a, (1, 2 * out_features), jnp.float32)

    out = jax.block_until_ready(sp_graph_attention_layer(x, adj, W, a))
    ref = _reference(x, adj, W, a)
    # Tolerance covers the bf16 elementwise/exp chain, bf16 aggregation matmul
    # and the approx reciprocal (inference accuracy budget).
    assert jnp.allclose(out, ref, atol=5e-2, rtol=5e-2), "mismatch (random adj)"

    # Second case: block-structured adjacency + forced small tiles to exercise
    # the empty-tile skip path (grid (2, 2); off-diagonal blocks have nnz == 0).
    N2 = 256
    k_x2, k_b = jax.random.split(k_adj)
    x2 = jax.random.normal(k_x2, (N2, in_features), dtype=jnp.float32)
    rnd = (jax.random.uniform(k_b, (N2, N2)) < 0.1).astype(jnp.float32)
    block_mask = jnp.kron(jnp.eye(2, dtype=jnp.float32),
                          jnp.ones((128, 128), jnp.float32))
    adj2 = jnp.maximum(rnd * block_mask, jnp.eye(N2, dtype=jnp.float32))
    out2 = jax.block_until_ready(
        sp_graph_attention_layer(x2, adj2, W, a, tm=128, tn=128))
    ref2 = _reference(x2, adj2, W, a)
    assert jnp.allclose(out2, ref2, atol=5e-2, rtol=5e-2), "mismatch (block adj)"

    # TODO(synk): training-mode dropout on edge_e is not implemented (eval mode).
    print("KERNEL_OK")
</pallas_src>

<mosaic_0001>
module attributes {stable_mosaic.version = 11 : i64} {
  func.func @_gat_kernel(%arg0: i32, %arg1: i32, %arg2: memref<2x1xi32, #tpu.memory_space<smem>>, %arg3: memref<64x1xbf16, #tpu.memory_space<vmem>>, %arg4: memref<1x128xbf16, #tpu.memory_space<vmem>>, %arg5: memref<64x128xi8, #tpu.memory_space<vmem>>, %arg6: memref<128x128xbf16, #tpu.memory_space<vmem>>, %arg7: memref<64x128xf32, #tpu.memory_space<vmem>>, %arg8: memref<64x128xf32, #tpu.memory_space<vmem>>) attributes {dimension_semantics = [#tpu.dimension_semantics<parallel>, #tpu.dimension_semantics<arbitrary>], iteration_bounds = array<i64: 2, 1>, scalar_prefetch = 1 : i64, scratch_operands = 1 : i64, tpu.core_type = #tpu.core_type<tc>, window_params = [{transform_indices = @transform_0, window_bounds = array<i64: 64, 1>}, {transform_indices = @transform_1, window_bounds = array<i64: 1, 128>}, {transform_indices = @transform_2, window_bounds = array<i64: 64, 128>}, {transform_indices = @transform_3, window_bounds = array<i64: 128, 128>}, {transform_indices = @transform_4, window_bounds = array<i64: 64, 128>}]} {
    %c0_i32 = arith.constant 0 : i32
    %0 = arith.cmpi eq, %arg1, %c0_i32 : i32
    %1 = arith.extui %0 : i1 to i32
    %c0_i32_0 = arith.constant 0 : i32
    %2 = arith.cmpi ne, %1, %c0_i32_0 : i32
    scf.if %2 {
      %cst = arith.constant 0.000000e+00 : f32
      %12 = vector.broadcast %cst : f32 to vector<64x128xf32>
      %c0 = arith.constant 0 : index
      %c0_5 = arith.constant 0 : index
      %13 = vector.load %arg8[%c0, %c0_5] : memref<64x128xf32, #tpu.memory_space<vmem>>, vector<64x128xf32>
      tpu.vector_store %arg8[%c0, %c0_5], %12 {strides = array<i32>} : memref<64x128xf32, #tpu.memory_space<vmem>>, vector<64x128xf32>,
    } else {
    }
    %3 = arith.index_cast %arg0 : i32 to index
    %4 = arith.index_cast %arg1 : i32 to index
    %5 = memref.load %arg2[%3, %4] : memref<2x1xi32, #tpu.memory_space<smem>>
    %c0_i32_1 = arith.constant 0 : i32
    %6 = arith.cmpi ne, %5, %c0_i32_1 : i32
    %7 = arith.extui %6 : i1 to i32
    %c0_i32_2 = arith.constant 0 : i32
    %8 = arith.cmpi ne, %7, %c0_i32_2 : i32
    scf.if %8 {
      %c0 = arith.constant 0 : index
      %c0_5 = arith.constant 0 : index
      %12 = vector.load %arg3[%c0, %c0_5] : memref<64x1xbf16, #tpu.memory_space<vmem>>, vector<64x1xbf16>
      %c0_6 = arith.constant 0 : index
      %c0_7 = arith.constant 0 : index
      %13 = vector.load %arg4[%c0_6, %c0_7] : memref<1x128xbf16, #tpu.memory_space<vmem>>, vector<1x128xbf16>
      %14 = vector.broadcast %12 : vector<64x1xbf16> to vector<64x128xbf16>
      %15 = vector.broadcast %13 : vector<1x128xbf16> to vector<64x128xbf16>
      %16 = arith.addf %14, %15 : vector<64x128xbf16>
      %cst = arith.constant 2.001950e-01 : bf16
      %17 = vector.broadcast %cst : bf16 to vector<64x128xbf16>
      %18 = arith.mulf %17, %16 : vector<64x128xbf16>
      %19 = arith.maximumf %16, %18 : vector<64x128xbf16>
      %c0_8 = arith.constant 0 : index
      %c0_9 = arith.constant 0 : index
      %20 = vector.load %arg5[%c0_8, %c0_9] : memref<64x128xi8, #tpu.memory_space<vmem>>, vector<64x128xi8>
      %c0_i8 = arith.constant 0 : i8
      %21 = vector.broadcast %c0_i8 : i8 to vector<64x128xi8>
      %22 = arith.cmpi ne, %20, %21 : vector<64x128xi8>
      %cst_10 = arith.constant 0.000000e+00 : bf16
      %23 = vector.broadcast %cst_10 : bf16 to vector<64x128xbf16>
      %24 = arith.subf %23, %19 : vector<64x128xbf16>
      %cst_11 = arith.constant 0xFF800000 : f32
      %25 = arith.truncf %cst_11 : f32 to bf16
      %26 = vector.broadcast %25 : bf16 to vector<64x128xbf16>
      %27 = arith.select %22, %24, %26 : vector<64x128xi1>, vector<64x128xbf16>
      %28 = math.exp %27 : vector<64x128xbf16>
      %c0_12 = arith.constant 0 : index
      %c0_13 = arith.constant 0 : index
      %29 = vector.load %arg8[%c0_12, %c0_13] : memref<64x128xf32, #tpu.memory_space<vmem>>, vector<64x128xf32>
      %c0_14 = arith.constant 0 : index
      %c0_15 = arith.constant 0 : index
      %30 = vector.load %arg6[%c0_14, %c0_15] : memref<128x128xbf16, #tpu.memory_space<vmem>>, vector<128x128xbf16>
      %cst_16 = arith.constant dense<0.000000e+00> : vector<64x128xf32>
      %31 = tpu.matmul %28, %30, %cst_16 {dimension_numbers = #tpu.dot_dimension_numbers<[1], [0], [0], [1], [0, 0, 1, 1], [], []>} : vector<64x128xbf16>, vector<128x128xbf16>, vector<64x128xf32> -> vector<64x128xf32>
      %32 = arith.addf %29, %31 : vector<64x128xf32>
      %c0_17 = arith.constant 0 : index
      %c0_18 = arith.constant 0 : index
      %33 = vector.load %arg8[%c0_17, %c0_18] : memref<64x128xf32, #tpu.memory_space<vmem>>, vector<64x128xf32>
      tpu.vector_store %arg8[%c0_17, %c0_18], %32 {strides = array<i32>} : memref<64x128xf32, #tpu.memory_space<vmem>>, vector<64x128xf32>,
    } else {
    }
    %c0_i32_3 = arith.constant 0 : i32
    %9 = arith.cmpi eq, %arg1, %c0_i32_3 : i32
    %10 = arith.extui %9 : i1 to i32
    %c0_i32_4 = arith.constant 0 : i32
    %11 = arith.cmpi ne, %10, %c0_i32_4 : i32
    scf.if %11 {
      %c0 = arith.constant 0 : index
      %c0_5 = arith.constant 0 : index
      %12 = vector.load %arg8[%c0, %c0_5] : memref<64x128xf32, #tpu.memory_space<vmem>>, vector<64x128xf32>
      %13 = vector.extract_strided_slice %12 {offsets = [0, 32], sizes = [64, 1], strides = [1, 1]} : vector<64x128xf32> to vector<64x1xf32>
      %14 = tpu.reciprocal %13 {approx = true} : vector<64x1xf32> -> vector<64x1xf32>
      %15 = vector.broadcast %14 : vector<64x1xf32> to vector<64x128xf32>
      %16 = arith.mulf %12, %15 : vector<64x128xf32>
      %cst = arith.constant 0.000000e+00 : f32
      %17 = vector.broadcast %cst : f32 to vector<64x128xf32>
      %18 = arith.cmpf ogt, %16, %17 : vector<64x128xf32>
      %19 = math.exp %16 : vector<64x128xf32>
      %cst_6 = arith.constant 1.000000e+00 : f32
      %20 = vector.broadcast %cst_6 : f32 to vector<64x128xf32>
      %21 = arith.subf %19, %20 : vector<64x128xf32>
      %22 = arith.select %18, %16, %21 : vector<64x128xi1>, vector<64x128xf32>
      %c0_7 = arith.constant 0 : index
      %c0_8 = arith.constant 0 : index
      %23 = vector.load %arg7[%c0_7, %c0_8] : memref<64x128xf32, #tpu.memory_space<vmem>>, vector<64x128xf32>
      tpu.vector_store %arg7[%c0_7, %c0_8], %22 {strides = array<i32>} : memref<64x128xf32, #tpu.memory_space<vmem>>, vector<64x128xf32>,
    } else {
    }
    return
  }
  func.func @transform_0(%arg0: i32, %arg1: i32, %arg2: memref<2x1xi32, #tpu.memory_space<smem>>) -> (i32, i32) {
    %c0_i32 = arith.constant 0 : i32
    %c0_i32_0 = arith.constant 0 : i32
    return %arg0, %c0_i32 : i32, i32
  }
  func.func @transform_1(%arg0: i32, %arg1: i32, %arg2: memref<2x1xi32, #tpu.memory_space<smem>>) -> (i32, i32) {
    %c0_i32 = arith.constant 0 : i32
    %c0_i32_0 = arith.constant 0 : i32
    return %c0_i32, %arg1 : i32, i32
  }
  func.func @transform_2(%arg0: i32, %arg1: i32, %arg2: memref<2x1xi32, #tpu.memory_space<smem>>) -> (i32, i32) {
    %c0_i32 = arith.constant 0 : i32
    return %arg0, %arg1 : i32, i32
  }
  func.func @transform_3(%arg0: i32, %arg1: i32, %arg2: memref<2x1xi32, #tpu.memory_space<smem>>) -> (i32, i32) {
    %c0_i32 = arith.constant 0 : i32
    %c0_i32_0 = arith.constant 0 : i32
    return %arg1, %c0_i32 : i32, i32
  }
  func.func @transform_4(%arg0: i32, %arg1: i32, %arg2: memref<2x1xi32, #tpu.memory_space<smem>>) -> (i32, i32) {
    %c0_i32 = arith.constant 0 : i32
    %c0_i32_0 = arith.constant 0 : i32
    return %arg0, %c0_i32 : i32, i32
  }
}

</mosaic_0001>

<llo_original>
// kernel: tpu_custom_call.1
$region0: #{tpu_custom_call.1}
  #allocation0 [shape = 'u32[]', space=smem, size = 0x4, offset = 0x4, fixed_abs, tag = 'smem constant byte address 0x4 - core index']
  #allocation1 [shape = 'u32[144,128]{1,0:T(1,128)}', space=vmem, size = 0x12000, scoped, tag = 'internal scratch']
  #allocation2 [shape = 'f32[64,128]{1,0:T(8,128)}', space=vmem, size = 0x8000, scoped, tag = 'scratch operand']
  #allocation3 [shape = 's32[1]{0}', space=sflag, size = 0x4, scoped, tag = 'scoped memory for tpu_custom_call.1']
  #allocation4 [shape = 'u8[1024]{0}', space=smem, size = 0x400, scoped, tag = 'prefetched SMEM operand 0']
  %s0 = inlined_call_operand.vmem [shape: s32[2,1], index: 0, kind: input, shape index: {}]
  %s1 = inlined_call_operand.vmem [shape: bf16[128,1], index: 1, kind: input, shape index: {}]
  %s2 = inlined_call_operand.vmem [shape: bf16[1,128], index: 2, kind: input, shape index: {}]
  %s3 = inlined_call_operand.hbm [shape: s8[128,128], index: 3, kind: input, shape index: {}]
  %s4 = inlined_call_operand.vmem [shape: bf16[128,128], index: 4, kind: input, shape index: {}]
  %s5 = inlined_call_operand.hbm [shape: f32[128,128], index: 5, kind: output, shape index: {}]
  %s6 = sld [smem:[#allocation0]]
  $region65: #{tpu_custom_call.1} parent=0
    _
  %s8 = ssub.s32 1, %s6
  %s9 = scalar_select 0, %s8, %s6
  %s10 = sshll.u32 %s0, 4
  %s11 = int_to_ptr.vmem [resolvable:$true] %s10
  %13 = dma.vmem_to_smem %s11, 32, [#allocation4], [#allocation3]
  %14 = dma.done [#allocation3], 32
  %15 = sfence
  $region1: #{tpu_custom_call.1} parent=0
    #allocation5 [shape = 'u8[16384]{0}', space=vmem, size = 0x4000, scoped, tag = 'input window, operand 3']
    #allocation6 [shape = 's32[2]{0}', space=sflag, size = 0x8, scoped, tag = 'scoped memory for tpu_custom_call.1']
    #allocation7 [shape = 's32[2]{0}', space=sflag, size = 0x8, scoped, tag = 'scoped memory for tpu_custom_call.1']
    #allocation8 [shape = 'u8[65536]{0}', space=vmem, size = 0x10000, scoped, tag = 'output window, operand 0']
    %16 = vsyncpa [#allocation6], 0
    %s17 = scalar_lea.sflag [#allocation6], 1
    %18 = vsyncpa %s17, 0
    %19 = vsyncpa [#allocation7], 0
    %s20 = scalar_lea.sflag [#allocation7], 1
    %21 = vsyncpa %s20, 0
    loop: start=0, step=1, limit=4
    $region2: #{tpu_custom_call.1} parent=1 // loop_pre_header
      _
    $region3: #{tpu_custom_call.1} parent=1 // loop_header
      %s23 = sphi 0, %s27
      %p24 = scmp.ge.s32.totalorder %s23, 4
      %s30 = sphi 0, %s42
      %s31 = sphi 0, %s38
      %s32 = sphi 0, %s30
      %s33 = sphi 0, %s31
      %s34 = sphi 0, %s32
      %s35 = sphi 0, %s33
      %s45 = sphi 0, %s47
      %s48 = sphi 0, %s45
      %s49 = sphi 0, %s48
      %s65 = sphi 0, %s49
      %s71 = sphi 0, %s73
      %s74 = sphi 0, %s71
      %s75 = sphi 0, %s74
      %s91 = sphi 0, %s75
      %s99 = sphi 0, %s101
      %s102 = sphi 0, %s99
      %s103 = sphi 0, %s102
      %s119 = sphi 0, %s103
      %s125 = sphi 0, %s127
      %s128 = sphi 0, %s125
      %s129 = sphi 0, %s128
      %s145 = sphi 0, %s129
      %s151 = sphi 0, %s153
      %s154 = sphi 0, %s151
      %s155 = sphi 0, %s154
      %s171 = sphi 0, %s155
    $region4: #{tpu_custom_call.1} parent=1 // loop_header_branch
      %26 = sbr.rel (%p24) target = $region8
    $region5: #{tpu_custom_call.1} parent=1 // loop_body
      %s28 = ssub.s32 %s23, 1
      %s29 = ssub.s32 %s23, 2
      %s36 = sadd.s32 1, %s31
      %p37 = scmp.ge.s32.totalorder %s36, 1
      %s38 = scalar_select %p37, 0, %s36
      %s39 = sadd.s32 1, %s30
      %s40 = scalar_select %p37, %s39, %s30
      %p41 = scmp.ge.s32.totalorder %s40, 2
      %s42 = scalar_select %p41, 0, %s40
      %s43 = ssub.s32 %s30, %s42
      %p44 = scmp.eq.s32.totalorder %s43, 0
      %s46 = sadd.s32 %s45, 1
      %s47 = scalar_select %p44, %s45, %s46
      %p50 = pneg %p44
      %p51 = scmp.eq.s32.totalorder %s23, 1
      %p52 = por %p50, %p51
      %p53 = scmp.ne.s32.totalorder %s45, %s48
      %p54 = scmp.eq.s32.totalorder %s23, 0
      %p55 = por %p53, %p54
      %p56 = scmp.ne.s32.totalorder %s45, %s48
      %p57 = scmp.eq.s32.totalorder %s28, 1
      %p58 = por %p56, %p57
      %p59 = scmp.ne.s32.totalorder %s48, %s49
      %p60 = scmp.eq.s32.totalorder %s28, 0
      %p61 = por %p59, %p60
      %p62 = scmp.ne.s32.totalorder %s48, %s49
      %p63 = scmp.eq.s32.totalorder %s29, 1
      %p64 = por %p62, %p63
      %p66 = scmp.ne.s32.totalorder %s49, %s65
      %p67 = scmp.eq.s32.totalorder %s29, 0
      %p68 = por %p66, %p67
      %s69 = ssub.s32 %s31, %s38
      %p70 = scmp.eq.s32.totalorder %s69, 0
      %s72 = sadd.s32 %s71, 1
      %s73 = scalar_select %p70, %s71, %s72
      %p76 = pneg %p70
      %p77 = scmp.eq.s32.totalorder %s23, 1
      %p78 = por %p76, %p77
      %p79 = scmp.ne.s32.totalorder %s71, %s74
      %p80 = scmp.eq.s32.totalorder %s23, 0
      %p81 = por %p79, %p80
      %p82 = scmp.ne.s32.totalorder %s71, %s74
      %p83 = scmp.eq.s32.totalorder %s28, 1
      %p84 = por %p82, %p83
      %p85 = scmp.ne.s32.totalorder %s74, %s75
      %p86 = scmp.eq.s32.totalorder %s28, 0
      %p87 = por %p85, %p86
      %p88 = scmp.ne.s32.totalorder %s74, %s75
      %p89 = scmp.eq.s32.totalorder %s29, 1
      %p90 = por %p88, %p89
      %p92 = scmp.ne.s32.totalorder %s75, %s91
      %p93 = scmp.eq.s32.totalorder %s29, 0
      %p94 = por %p92, %p93
      %s95 = ssub.s32 %s30, %s42
      %s96 = ssub.s32 %s31, %s38
      %s97 = sor.u32 %s95, %s96
      %p98 = scmp.eq.s32.totalorder %s97, 0
      %s100 = sadd.s32 %s99, 1
      %s101 = scalar_select %p98, %s99, %s100
      %p104 = pneg %p98
      %p105 = scmp.eq.s32.totalorder %s23, 1
      %p106 = por %p104, %p105
      %p107 = scmp.ne.s32.totalorder %s99, %s102
      %p108 = scmp.eq.s32.totalorder %s23, 0
      %p109 = por %p107, %p108
      %p110 = scmp.ne.s32.totalorder %s99, %s102
      %p111 = scmp.eq.s32.totalorder %s28, 1
      %p112 = por %p110, %p111
      %p113 = scmp.ne.s32.totalorder %s102, %s103
      %p114 = scmp.eq.s32.totalorder %s28, 0
      %p115 = por %p113, %p114
      %p116 = scmp.ne.s32.totalorder %s102, %s103
      %p117 = scmp.eq.s32.totalorder %s29, 1
      %p118 = por %p116, %p117
      %p120 = scmp.ne.s32.totalorder %s103, %s119
      %p121 = scmp.eq.s32.totalorder %s29, 0
      %p122 = por %p120, %p121
      %s123 = ssub.s32 %s31, %s38
      %p124 = scmp.eq.s32.totalorder %s123, 0
      %s126 = sadd.s32 %s125, 1
      %s127 = scalar_select %p124, %s125, %s126
      %p130 = pneg %p124
      %p131 = scmp.eq.s32.totalorder %s23, 1
      %p132 = por %p130, %p131
      %p133 = scmp.ne.s32.totalorder %s125, %s128
      %p134 = scmp.eq.s32.totalorder %s23, 0
      %p135 = por %p133, %p134
      %p136 = scmp.ne.s32.totalorder %s125, %s128
      %p137 = scmp.eq.s32.totalorder %s28, 1
      %p138 = por %p136, %p137
      %p139 = scmp.ne.s32.totalorder %s128, %s129
      %p140 = scmp.eq.s32.totalorder %s28, 0
      %p141 = por %p139, %p140
      %p142 = scmp.ne.s32.totalorder %s128, %s129
      %p143 = scmp.eq.s32.totalorder %s29, 1
      %p144 = por %p142, %p143
      %p146 = scmp.ne.s32.totalorder %s129, %s145
      %p147 = scmp.eq.s32.totalorder %s29, 0
      %p148 = por %p146, %p147
      %s149 = ssub.s32 %s30, %s42
      %p150 = scmp.eq.s32.totalorder %s149, 0
      %s152 = sadd.s32 %s151, 1
      %s153 = scalar_select %p150, %s151, %s152
      %p156 = pneg %p150
      %p157 = scmp.eq.s32.totalorder %s23, 1
      %p158 = por %p156, %p157
      %p159 = scmp.ne.s32.totalorder %s151, %s154
      %p160 = scmp.eq.s32.totalorder %s23, 0
      %p161 = por %p159, %p160
      %p162 = scmp.ne.s32.totalorder %s151, %s154
      %p163 = scmp.eq.s32.totalorder %s28, 1
      %p164 = por %p162, %p163
      %p165 = scmp.ne.s32.totalorder %s154, %s155
      %p166 = scmp.eq.s32.totalorder %s28, 0
      %p167 = por %p165, %p166
      %p168 = scmp.ne.s32.totalorder %s154, %s155
      %p169 = scmp.eq.s32.totalorder %s29, 1
      %p170 = por %p168, %p169
      %p172 = scmp.ne.s32.totalorder %s155, %s171
      %p173 = scmp.eq.s32.totalorder %s29, 0
      %p174 = por %p172, %p173
      %p175 = scmp.le.s32.totalorder 1, %s23
      %p176 = scmp.lt.s32.totalorder %s23, 3
      %p177 = pnand %p175, %p176
      %p178 = pneg %p177
      // Predicated region
      $region9: #{tpu_custom_call.1} parent=5 // pred_check
        _
      $region10: #{tpu_custom_call.1} parent=5 // pred_check_branch
        %180 = sbr.rel (%p177) target = $region12
      $region11: #{tpu_custom_call.1} parent=5 // pred_region
        %s181 = ssub.s32 %s23, 1
        // Predicated region
        $region13: #{tpu_custom_call.1} parent=11 // pred_check
          %p182 = pneg %p87
        $region14: #{tpu_custom_call.1} parent=11 // pred_check_branch
          %184 = sbr.rel (%p182) target = $region16
        $region15: #{tpu_custom_call.1} parent=11 // pred_region
          %p185 = scmp.lt.s32.totalorder %s33, 0
          %s186 = scalar_select %p185, %s33, 0
          %s187 = scalar_lea.vmem %s2, %s186
        $region16: #{tpu_custom_call.1} parent=11 // pred_fallthru
          _
        // Predicated region
        $region17: #{tpu_custom_call.1} parent=11 // pred_check
          %p188 = pneg %p141
        $region18: #{tpu_custom_call.1} parent=11 // pred_check_branch
          %190 = sbr.rel (%p188) target = $region20
        $region19: #{tpu_custom_call.1} parent=11 // pred_region
          %s191 = smul.u32 16, %s33
          %p192 = scmp.lt.s32.totalorder %s191, 15
          %s193 = scalar_select %p192, %s191, 15
          %s194 = smul.addr %s193, 4
          %s195 = scalar_lea.vmem %s4, %s194
          %s196 = smul.u32 16, %s33
        $region20: #{tpu_custom_call.1} parent=11 // pred_fallthru
          _
      $region12: #{tpu_custom_call.1} parent=5 // pred_fallthru
        _
      %p197 = scmp.lt.s32.totalorder %s23, 2
      // Predicated region
      $region21: #{tpu_custom_call.1} parent=5 // pred_check
        %p198 = pneg %p197
      $region22: #{tpu_custom_call.1} parent=5 // pred_check_branch
        %200 = sbr.rel (%p198) target = $region24
      $region23: #{tpu_custom_call.1} parent=5 // pred_region
        // Predicated region
        $region25: #{tpu_custom_call.1} parent=23 // pred_check
          %p201 = pneg %p55
        $region26: #{tpu_custom_call.1} parent=23 // pred_check_branch
          %203 = sbr.rel (%p201) target = $region28
        $region27: #{tpu_custom_call.1} parent=23 // pred_region
          %s204 = smul.u32 8, %s30
          %p205 = scmp.lt.s32.totalorder %s204, 15
          %s206 = scalar_select %p205, %s204, 15
          %s207 = smul.addr %s206, 4
          %s208 = scalar_lea.vmem %s1, %s207
          %s209 = smul.u32 8, %s30
        $region28: #{tpu_custom_call.1} parent=23 // pred_fallthru
          _
        // Predicated region
        $region29: #{tpu_custom_call.1} parent=23 // pred_check
          %p210 = pneg %p109
        $region30: #{tpu_custom_call.1} parent=23 // pred_check_branch
          %212 = sbr.rel (%p210) target = $region32
        $region31: #{tpu_custom_call.1} parent=23 // pred_region
          %s213 = sand.u32 %s99, 1
          %s214 = scalar_lea.sflag [#allocation6], %s213
          %s215 = sand.u32 %s99, 1
          %s216 = smul.addr %s215, 16
          %s217 = scalar_lea.vmem [#allocation5], %s216
          %s218 = smul.u32 2, %s30
          %s220 = ssub.s32 256, 256
          %221 = vsyncadd %s214, %s220
          %s222 = sadd.s32 %s31, %s218
          %s223 = smul.addr %s222, 128
          %s224 = scalar_lea.hbm %s3, %s223
          %s225 = sshll.u32 %s217, 4
          %s226 = int_to_ptr.vmem [resolvable:$true] %s225
          %231 = dma.hbm_to_vmem [thread:$0]  %s224, 256, %s226, %s214, 128, 128, 8
        $region32: #{tpu_custom_call.1} parent=23 // pred_fallthru
          _
      $region24: #{tpu_custom_call.1} parent=5 // pred_fallthru
        _
      %p232 = scmp.le.s32.totalorder 1, %s23
      %p233 = scmp.lt.s32.totalorder %s23, 3
      %p234 = pnand %p232, %p233
      %p235 = pneg %p234
      // Predicated region
      $region33: #{tpu_custom_call.1} parent=5 // pred_check
        _
      $region34: #{tpu_custom_call.1} parent=5 // pred_check_branch
        %237 = sbr.rel (%p234) target = $region36
      $region35: #{tpu_custom_call.1} parent=5 // pred_region
        %s238 = ssub.s32 %s23, 1
        %s239 = sand.u32 %s102, 1
        %s240 = scalar_lea.sflag [#allocation6], %s239
        %s241 = sand.u32 %s102, 1
        %s242 = smul.addr %s241, 16
        %s243 = scalar_lea.vmem [#allocation5], %s242
        // Predicated region
        $region37: #{tpu_custom_call.1} parent=35 // pred_check
          %p244 = pneg %p115
        $region38: #{tpu_custom_call.1} parent=35 // pred_check_branch
          %246 = sbr.rel (%p244) target = $region40
        $region39: #{tpu_custom_call.1} parent=35 // pred_region
          %247 = dma.done %s240, 256
        $region40: #{tpu_custom_call.1} parent=35 // pred_fallthru
          _
        %s248 = smul.u32 8, %s32
        %p249 = scmp.lt.s32.totalorder %s248, 15
        %s250 = scalar_select %p249, %s248, 15
        %s251 = smul.addr %s250, 4
        %s252 = scalar_lea.vmem %s1, %s251
        %p253 = pneg %p61
        %p254 = pneg %p58
        %p255 = scmp.lt.s32.totalorder %s33, 0
        %s256 = scalar_select %p255, %s33, 0
        %s257 = scalar_lea.vmem %s2, %s256
        %p258 = pneg %p87
        %p259 = pneg %p84
        %s260 = sand.u32 %s102, 1
        %s261 = scalar_lea.sflag [#allocation6], %s260
        %s262 = sand.u32 %s102, 1
        %s263 = smul.addr %s262, 16
        %s264 = scalar_lea.vmem [#allocation5], %s263
        %p265 = pneg %p115
        %p266 = pneg %p112
        %s267 = smul.u32 16, %s33
        %p268 = scmp.lt.s32.totalorder %s267, 15
        %s269 = scalar_select %p268, %s267, 15
        %s270 = smul.addr %s269, 4
        %s271 = scalar_lea.vmem %s4, %s270
        %p272 = pneg %p141
        %p273 = pneg %p138
        %p274 = pneg %p167
        %p275 = pneg %p164
        %s276 = sand.u32 %s154, 1
        %s277 = scalar_lea.sflag [#allocation7], %s276
        %s278 = sand.u32 %s154, 1
        %s279 = smul.addr %s278, 64
        %s280 = scalar_lea.vmem [#allocation8], %s279
        %s281 = smul.u32 8, %s32
        %p282 = scmp.lt.s32.totalorder %s281, 15
        %s283 = scalar_select %p282, %s281, 15
        %s284 = smul.addr %s283, 4
        %s285 = scalar_lea.vmem %s1, %s284
        %s286 = smul.u32 8, %s32
        %p287 = scmp.lt.s32.totalorder %s33, 0
        %s288 = scalar_select %p287, %s33, 0
        %s289 = scalar_lea.vmem %s2, %s288
        %s290 = smul.u32 2, %s32
        %s291 = smul.u32 16, %s33
        %p292 = scmp.lt.s32.totalorder %s291, 15
        %s293 = scalar_select %p292, %s291, 15
        %s294 = smul.addr %s293, 4
        %s295 = scalar_lea.vmem %s4, %s294
        %s296 = smul.u32 16, %s33
        %s297 = smul.u32 8, %s32
        %p304 = scmp.eq.s32.totalorder %s33, 0
        // Predicated region
        $region41: #{tpu_custom_call.1} parent=35 // pred_check
          %p305 = pneg %p304
        $region42: #{tpu_custom_call.1} parent=35 // pred_check_branch
          %307 = sbr.rel (%p305) target = $region44
        $region43: #{tpu_custom_call.1} parent=35 // pred_region
          %308 = vst [vmem:[#allocation2] sm:$0xff] 0.0
          %309 = vst [vmem:[#allocation2 + $0x8] sm:$0xff] 0.0
          %310 = vst [vmem:[#allocation2 + $0x10] sm:$0xff] 0.0
          %311 = vst [vmem:[#allocation2 + $0x18] sm:$0xff] 0.0
          %312 = vst [vmem:[#allocation2 + $0x20] sm:$0xff] 0.0
          %313 = vst [vmem:[#allocation2 + $0x28] sm:$0xff] 0.0
          %314 = vst [vmem:[#allocation2 + $0x30] sm:$0xff] 0.0
          %315 = vst [vmem:[#allocation2 + $0x38] sm:$0xff] 0.0
        $region44: #{tpu_custom_call.1} parent=35 // pred_fallthru
          _
        %s316 = sshra.s32 %s33, 7
        %s317 = sand.u32 %s33, 127
        %s318 = sadd.s32 %s316, %s32
        %s319 = smul.u32 %s318, 128
        %s320 = sshra.s32 %s33, 7
        %s321 = sand.u32 %s33, 127
        %s322 = sadd.s32 %s319, %s321
        %s323 = sld [smem:[#allocation4 + %s322]]
        %p324 = scmp.ne.s32.totalorder %s323, 0
        // Predicated region
        $region45: #{tpu_custom_call.1} parent=35 // pred_check
          %p325 = pneg %p324
        $region46: #{tpu_custom_call.1} parent=35 // pred_check_branch
          %327 = sbr.rel (%p325) target = $region48
        $region47: #{tpu_custom_call.1} parent=35 // pred_region
          %v328 = vld [vmem:[%s285] sm:$0xf]
          %v329 = vld [vmem:[%s285 + $0x4] sm:$0xf]
          %v330 = vld [vmem:[%s285 + $0x8] sm:$0xf]
          %v331 = vld [vmem:[%s285 + $0xc] sm:$0xf]
          %v332 = vld [vmem:[%s285 + $0x10] sm:$0xf]
          %v333 = vld [vmem:[%s285 + $0x14] sm:$0xf]
          %v334 = vld [vmem:[%s285 + $0x18] sm:$0xf]
          %v335 = vld [vmem:[%s285 + $0x1c] sm:$0xf]
          %v336 = vld [vmem:[%s289] sm:$0x1]
          %338 = vset.pattern.permute.xlu0 0
          %339 = vperm.xlu0 %338, %v328
          %v340 = vpop.permute.xlu0 %339
          %v343 = vunpack.c.l.s4 839922192
          %v344 = vunpack.c.0.s8 %v343
          %v345 = vlaneseq
          %v346 = vshrl.u32 %v345, 7
          %v347 = vsub.s32 %v344, %v346
          %v348 = vrot.slane %v340, %v347
          %350 = vset.pattern.permute.xlu0 0
          %351 = vperm.xlu0 %350, %v329
          %v352 = vpop.permute.xlu0 %351
          %v355 = vunpack.c.l.s4 839922192
          %v356 = vunpack.c.0.s8 %v355
          %v357 = vlaneseq
          %v358 = vshrl.u32 %v357, 7
          %v359 = vsub.s32 %v356, %v358
          %v360 = vrot.slane %v352, %v359
          %362 = vset.pattern.permute.xlu0 0
          %363 = vperm.xlu0 %362, %v330
          %v364 = vpop.permute.xlu0 %363
          %v367 = vunpack.c.l.s4 839922192
          %v368 = vunpack.c.0.s8 %v367
          %v369 = vlaneseq
          %v370 = vshrl.u32 %v369, 7
          %v371 = vsub.s32 %v368, %v370
          %v372 = vrot.slane %v364, %v371
          %374 = vset.pattern.permute.xlu0 0
          %375 = vperm.xlu0 %374, %v331
          %v376 = vpop.permute.xlu0 %375
          %v379 = vunpack.c.l.s4 839922192
          %v380 = vunpack.c.0.s8 %v379
          %v381 = vlaneseq
          %v382 = vshrl.u32 %v381, 7
          %v383 = vsub.s32 %v380, %v382
          %v384 = vrot.slane %v376, %v383
          %386 = vset.pattern.permute.xlu0 0
          %387 = vperm.xlu0 %386, %v332
          %v388 = vpop.permute.xlu0 %387
          %v391 = vunpack.c.l.s4 839922192
          %v392 = vunpack.c.0.s8 %v391
          %v393 = vlaneseq
          %v394 = vshrl.u32 %v393, 7
          %v395 = vsub.s32 %v392, %v394
          %v396 = vrot.slane %v388, %v395
          %398 = vset.pattern.permute.xlu0 0
          %399 = vperm.xlu0 %398, %v333
          %v400 = vpop.permute.xlu0 %399
          %v403 = vunpack.c.l.s4 839922192
          %v404 = vunpack.c.0.s8 %v403
          %v405 = vlaneseq
          %v406 = vshrl.u32 %v405, 7
          %v407 = vsub.s32 %v404, %v406
          %v408 = vrot.slane %v400, %v407
          %410 = vset.pattern.permute.xlu0 0
          %411 = vperm.xlu0 %410, %v334
          %v412 = vpop.permute.xlu0 %411
          %v415 = vunpack.c.l.s4 839922192
          %v416 = vunpack.c.0.s8 %v415
          %v417 = vlaneseq
          %v418 = vshrl.u32 %v417, 7
          %v419 = vsub.s32 %v416, %v418
          %v420 = vrot.slane %v412, %v419
          %422 = vset.pattern.permute.xlu0 0
          %423 = vperm.xlu0 %422, %v335
          %v424 = vpop.permute.xlu0 %423
          %v427 = vunpack.c.l.s4 839922192
          %v428 = vunpack.c.0.s8 %v427
          %v429 = vlaneseq
          %v430 = vshrl.u32 %v429, 7
          %v431 = vsub.s32 %v428, %v430
          %v432 = vrot.slane %v424, %v431
          %v434 = vpack.i.b16 %v336, %v336
          %v436 = vlaneseq
          %v437 = vshrl.u32 %v436, 7
          %v438 = vsub.s32 0, %v437
          %v439 = vrot.slane %v434, %v438
          %v441 = vunpack.c.l.b16 %v439
          %v442 = vpack.c.b16 %v441, %v441
          %v444 = vadd.bf16 %v348, %v442
          %v445 = vadd.bf16 %v360, %v442
          %v446 = vadd.bf16 %v372, %v442
          %v447 = vadd.bf16 %v384, %v442
          %v448 = vadd.bf16 %v396, %v442
          %v449 = vadd.bf16 %v408, %v442
          %v450 = vadd.bf16 %v420, %v442
          %v451 = vadd.bf16 %v432, %v442
          %v452 = vmul.bf16 %v444, 1045249613
          %v453 = vmul.bf16 %v445, 1045249613
          %v454 = vmul.bf16 %v446, 1045249613
          %v455 = vmul.bf16 %v447, 1045249613
          %v456 = vmul.bf16 %v448, 1045249613
          %v457 = vmul.bf16 %v449, 1045249613
          %v458 = vmul.bf16 %v450, 1045249613
          %v459 = vmul.bf16 %v451, 1045249613
          %v460 = vmax.bf16 %v444, %v452
          %v461 = vmax.bf16 %v445, %v453
          %v462 = vmax.bf16 %v446, %v454
          %v463 = vmax.bf16 %v447, %v455
          %v464 = vmax.bf16 %v448, %v456
          %v465 = vmax.bf16 %v449, %v457
          %v466 = vmax.bf16 %v450, %v458
          %v467 = vmax.bf16 %v451, %v459
          %v468 = vld [vmem:[%s243] sm:$0xff]
          %v469 = vld [vmem:[%s243 + $0x8] sm:$0xff]
          %vm470 = vnez %v468
          %vm471 = vnez %v469
          %v472 = vsub.bf16 0, %v460
          %v473 = vsub.bf16 0, %v461
          %v474 = vsub.bf16 0, %v462
          %v475 = vsub.bf16 0, %v463
          %v476 = vsub.bf16 0, %v464
          %v477 = vsub.bf16 0, %v465
          %v478 = vsub.bf16 0, %v466
          %v479 = vsub.bf16 0, %v467
          %v480 = vsel %vm470, 16843009, 0
          %v481 = vsel %vm471, 16843009, 0
          %v482 = vunpack.c.0.s8 %v480
          %v483 = vunpack.c.1.s8 %v480
          %v484 = vunpack.c.2.s8 %v480
          %v485 = vunpack.c.3.s8 %v480
          %v486 = vunpack.c.0.s8 %v481
          %v487 = vunpack.c.1.s8 %v481
          %v488 = vunpack.c.2.s8 %v481
          %v489 = vunpack.c.3.s8 %v481
          %v490 = vpack.c.b16 %v482, %v482
          %v491 = vpack.c.b8 %v490, %v490
          %v492 = vpack.c.b16 %v483, %v483
          %v493 = vpack.c.b8 %v492, %v492
          %v494 = vpack.c.b16 %v484, %v484
          %v495 = vpack.c.b8 %v494, %v494
          %v496 = vpack.c.b16 %v485, %v485
          %v497 = vpack.c.b8 %v496, %v496
          %v498 = vpack.c.b16 %v486, %v486
          %v499 = vpack.c.b8 %v498, %v498
          %v500 = vpack.c.b16 %v487, %v487
          %v501 = vpack.c.b8 %v500, %v500
          %v502 = vpack.c.b16 %v488, %v488
          %v503 = vpack.c.b8 %v502, %v502
          %v504 = vpack.c.b16 %v489, %v489
          %v505 = vpack.c.b8 %v504, %v504
          %vm506 = vnez %v491
          %vm507 = vnez %v493
          %vm508 = vnez %v495
          %vm509 = vnez %v497
          %vm510 = vnez %v499
          %vm511 = vnez %v501
          %vm512 = vnez %v503
          %vm513 = vnez %v505
          %v514 = vsel %vm506, 16843009, 0
          %v515 = vsel %vm507, 16843009, 0
          %v516 = vsel %vm508, 16843009, 0
          %v517 = vsel %vm509, 16843009, 0
          %v518 = vsel %vm510, 16843009, 0
          %v519 = vsel %vm511, 16843009, 0
          %v520 = vsel %vm512, 16843009, 0
          %v521 = vsel %vm513, 16843009, 0
          %v522 = vunpack.c.1.s8 %v514
          %v523 = vunpack.c.0.s8 %v514
          %v524 = vpack.c.b16 %v522, %v523
          %v525 = vunpack.c.1.s8 %v515
          %v526 = vunpack.c.0.s8 %v515
          %v527 = vpack.c.b16 %v525, %v526
          %v528 = vunpack.c.1.s8 %v516
          %v529 = vunpack.c.0.s8 %v516
          %v530 = vpack.c.b16 %v528, %v529
          %v531 = vunpack.c.1.s8 %v517
          %v532 = vunpack.c.0.s8 %v517
          %v533 = vpack.c.b16 %v531, %v532
          %v534 = vunpack.c.1.s8 %v518
          %v535 = vunpack.c.0.s8 %v518
          %v536 = vpack.c.b16 %v534, %v535
          %v537 = vunpack.c.1.s8 %v519
          %v538 = vunpack.c.0.s8 %v519
          %v539 = vpack.c.b16 %v537, %v538
          %v540 = vunpack.c.1.s8 %v520
          %v541 = vunpack.c.0.s8 %v520
          %v542 = vpack.c.b16 %v540, %v541
          %v543 = vunpack.c.1.s8 %v521
          %v544 = vunpack.c.0.s8 %v521
          %v545 = vpack.c.b16 %v543, %v544
          %vm546 = vcmp.ne.s16.totalorder %v524, 0
          %vm547 = vcmp.ne.s16.totalorder %v527, 0
          %vm548 = vcmp.ne.s16.totalorder %v530, 0
          %vm549 = vcmp.ne.s16.totalorder %v533, 0
          %vm550 = vcmp.ne.s16.totalorder %v536, 0
          %vm551 = vcmp.ne.s16.totalorder %v539, 0
          %vm552 = vcmp.ne.s16.totalorder %v542, 0
          %vm553 = vcmp.ne.s16.totalorder %v545, 0
          %v554 = vsel %vm546, %v472, 4286644096
          %v555 = vsel %vm547, %v473, 4286644096
          %v556 = vsel %vm548, %v474, 4286644096
          %v557 = vsel %vm549, %v475, 4286644096
          %v558 = vsel %vm550, %v476, 4286644096
          %v559 = vsel %vm551, %v477, 4286644096
          %v560 = vsel %vm552, %v478, 4286644096
          %v561 = vsel %vm553, %v479, 4286644096
          %v563 = vmul.bf16 %v554, 1069105081
          %v564 = vpow.bf16.pop %v563
          %v566 = vmul.bf16 %v555, 1069105081
          %v567 = vpow.bf16.pop %v566
          %v569 = vmul.bf16 %v556, 1069105081
          %v570 = vpow.bf16.pop %v569
          %v572 = vmul.bf16 %v557, 1069105081
          %v573 = vpow.bf16.pop %v572
          %v575 = vmul.bf16 %v558, 1069105081
          %v576 = vpow.bf16.pop %v575
          %v578 = vmul.bf16 %v559, 1069105081
          %v579 = vpow.bf16.pop %v578
          %v581 = vmul.bf16 %v560, 1069105081
          %v582 = vpow.bf16.pop %v581
          %v584 = vmul.bf16 %v561, 1069105081
          %v585 = vpow.bf16.pop %v584
          %v586 = vld [vmem:[#allocation2] sm:$0xff]
          %v587 = vld [vmem:[#allocation2 + $0x8] sm:$0xff]
          %v588 = vld [vmem:[#allocation2 + $0x10] sm:$0xff]
          %v589 = vld [vmem:[#allocation2 + $0x18] sm:$0xff]
          %v590 = vld [vmem:[#allocation2 + $0x20] sm:$0xff]
          %v591 = vld [vmem:[#allocation2 + $0x28] sm:$0xff]
          %v592 = vld [vmem:[#allocation2 + $0x30] sm:$0xff]
          %v593 = vld [vmem:[#allocation2 + $0x38] sm:$0xff]
          %v594 = vld [vmem:[%s295] sm:$0xf]
          %v595 = vld [vmem:[%s295 + $0x4] sm:$0xf]
          %v596 = vld [vmem:[%s295 + $0x8] sm:$0xf]
          %v597 = vld [vmem:[%s295 + $0xc] sm:$0xf]
          %v598 = vld [vmem:[%s295 + $0x10] sm:$0xf]
          %v599 = vld [vmem:[%s295 + $0x14] sm:$0xf]
          %v600 = vld [vmem:[%s295 + $0x18] sm:$0xf]
          %v601 = vld [vmem:[%s295 + $0x1c] sm:$0xf]
          %v602 = vld [vmem:[%s295 + $0x20] sm:$0xf]
          %v603 = vld [vmem:[%s295 + $0x24] sm:$0xf]
          %v604 = vld [vmem:[%s295 + $0x28] sm:$0xf]
          %v605 = vld [vmem:[%s295 + $0x2c] sm:$0xf]
          %v606 = vld [vmem:[%s295 + $0x30] sm:$0xf]
          %v607 = vld [vmem:[%s295 + $0x34] sm:$0xf]
          %v608 = vld [vmem:[%s295 + $0x38] sm:$0xf]
          %v609 = vld [vmem:[%s295 + $0x3c] sm:$0xf]
          %v618 = vunpack.c.l.b16 %v564
          %v619 = vunpack.c.l.b16 %v567
          %v620 = vunpack.c.l.b16 %v570
          %v621 = vunpack.c.l.b16 %v573
          %v622 = vunpack.c.l.b16 %v576
          %v623 = vunpack.c.l.b16 %v579
          %v624 = vunpack.c.l.b16 %v582
          %v625 = vunpack.c.l.b16 %v585
          %v626 = vpack.c.b16 %v619, %v618
          %v627 = vpack.c.b16 %v621, %v620
          %v628 = vpack.c.b16 %v623, %v622
          %v629 = vpack.c.b16 %v625, %v624
          %v650 = vunpack.c.l.b16 %v594
          %v651 = vunpack.c.l.b16 %v595
          %v652 = vunpack.c.l.b16 %v596
          %v653 = vunpack.c.l.b16 %v597
          %v654 = vunpack.c.l.b16 %v598
          %v655 = vunpack.c.l.b16 %v599
          %v656 = vunpack.c.l.b16 %v600
          %v657 = vunpack.c.l.b16 %v601
          %v658 = vunpack.c.l.b16 %v602
          %v659 = vunpack.c.l.b16 %v603
          %v660 = vunpack.c.l.b16 %v604
          %v661 = vunpack.c.l.b16 %v605
          %v662 = vunpack.c.l.b16 %v606
          %v663 = vunpack.c.l.b16 %v607
          %v664 = vunpack.c.l.b16 %v608
          %v665 = vunpack.c.l.b16 %v609
          %v666 = vpack.c.b16 %v651, %v650
          %v667 = vpack.c.b16 %v653, %v652
          %v668 = vpack.c.b16 %v655, %v654
          %v669 = vpack.c.b16 %v657, %v656
          %v670 = vpack.c.b16 %v659, %v658
          %v671 = vpack.c.b16 %v661, %v660
          %v672 = vpack.c.b16 %v663, %v662
          %v673 = vpack.c.b16 %v665, %v664
          %682 = vmatprep.subr.bf16.mxu0 0
          %683 = vmatpush1.bf16.msra.mxu0 %v666
          %684 = vmatprep.subr.bf16.mxu0 0
          %685 = vmatpush1.bf16.msra.mxu0 %v667
          %686 = vmatprep.subr.bf16.mxu0 0
          %687 = vmatpush1.bf16.msra.mxu0 %v668
          %688 = vmatprep.subr.bf16.mxu0 0
          %689 = vmatpush1.bf16.msra.mxu0 %v669
          %690 = vmatprep.subr.bf16.mxu0 0
          %691 = vmatpush1.bf16.msra.mxu0 %v670
          %692 = vmatprep.subr.bf16.mxu0 0
          %693 = vmatpush1.bf16.msra.mxu0 %v671
          %694 = vmatprep.subr.bf16.mxu0 0
          %695 = vmatpush1.bf16.msra.mxu0 %v672
          %696 = vmatprep.subr.bf16.mxu0 0
          %697 = vmatpush1.bf16.msra.mxu0 %v673
          %698 = vmatprep.subr.bf16.mxu0 0
          %699 = vmatpush1.bf16.msra.mxu0 0
          %700 = vmatprep.subr.bf16.mxu0 0
          %701 = vmatpush1.bf16.msra.mxu0 0
          %702 = vmatprep.subr.bf16.mxu0 0
          %703 = vmatpush1.bf16.msra.mxu0 0
          %704 = vmatprep.subr.bf16.mxu0 0
          %705 = vmatpush1.bf16.msra.mxu0 0
          %706 = vmatprep.subr.bf16.mxu0 0
          %707 = vmatpush1.bf16.msra.mxu0 0
          %708 = vmatprep.subr.bf16.mxu0 0
          %709 = vmatpush1.bf16.msra.mxu0 0
          %710 = vmatprep.subr.bf16.mxu0 0
          %711 = vmatpush1.bf16.msra.mxu0 0
          %712 = vmatprep.subr.bf16.mxu0 0
          %713 = vmatpush1.bf16.msra.mxu0 0
          %714 = vmatprep.mubr.bf16.mxu0 0
          %715 = vmatmul.mubr.bf16.gmra.mrb[0].mxu0 %v626
          %v716 = vpop.f32.mrb[0].mxu0
          %v717 = vadd.f32 0.0, %v716
          %v718 = vpop.f32.mrb[0].mxu0
          %v719 = vpop.f32.mrb[0].mxu0
          %v720 = vadd.f32 0.0, %v719
          %v721 = vpop.f32.mrb[0].mxu0
          %722 = vmatprep.mubr.bf16.mxu0 0
          %723 = vmatmul.mubr.bf16.gmra.mrb[0].mxu0 %v627
          %v724 = vpop.f32.mrb[0].mxu0
          %v725 = vadd.f32 0.0, %v724
          %v726 = vpop.f32.mrb[0].mxu0
          %v727 = vpop.f32.mrb[0].mxu0
          %v728 = vadd.f32 0.0, %v727
          %v729 = vpop.f32.mrb[0].mxu0
          %730 = vmatprep.mubr.bf16.mxu0 0
          %731 = vmatmul.mubr.bf16.gmra.mrb[0].mxu0 %v628
          %v732 = vpop.f32.mrb[0].mxu0
          %v733 = vadd.f32 0.0, %v732
          %v734 = vpop.f32.mrb[0].mxu0
          %v735 = vpop.f32.mrb[0].mxu0
          %v736 = vadd.f32 0.0, %v735
          %v737 = vpop.f32.mrb[0].mxu0
          %738 = vmatprep.mubr.bf16.mxu0 0
          %739 = vmatmul.mubr.bf16.gmra.mrb[0].mxu0 %v629
          %v740 = vpop.f32.mrb[0].mxu0
          %v741 = vadd.f32 0.0, %v740
          %v742 = vpop.f32.mrb[0].mxu0
          %v743 = vpop.f32.mrb[0].mxu0
          %v744 = vadd.f32 0.0, %v743
          %v745 = vpop.f32.mrb[0].mxu0
          %746 = vdwg.mxu0
          %v747 = vadd.f32 %v586, %v717
          %v748 = vadd.f32 %v587, %v720
          %v749 = vadd.f32 %v588, %v725
          %v750 = vadd.f32 %v589, %v728
          %v751 = vadd.f32 %v590, %v733
          %v752 = vadd.f32 %v591, %v736
          %v753 = vadd.f32 %v592, %v741
          %v754 = vadd.f32 %v593, %v744
          %755 = vst [vmem:[#allocation2] sm:$0xff] %v747
          %756 = vst [vmem:[#allocation2 + $0x8] sm:$0xff] %v748
          %757 = vst [vmem:[#allocation2 + $0x10] sm:$0xff] %v749
          %758 = vst [vmem:[#allocation2 + $0x18] sm:$0xff] %v750
          %759 = vst [vmem:[#allocation2 + $0x20] sm:$0xff] %v751
          %760 = vst [vmem:[#allocation2 + $0x28] sm:$0xff] %v752
          %761 = vst [vmem:[#allocation2 + $0x30] sm:$0xff] %v753
          %762 = vst [vmem:[#allocation2 + $0x38] sm:$0xff] %v754
        $region48: #{tpu_custom_call.1} parent=35 // pred_fallthru
          _
        // Predicated region
        $region49: #{tpu_custom_call.1} parent=35 // pred_check
          %p763 = pneg %p304
        $region50: #{tpu_custom_call.1} parent=35 // pred_check_branch
          %765 = sbr.rel (%p763) target = $region52
        $region51: #{tpu_custom_call.1} parent=35 // pred_region
          %v766 = vld [vmem:[#allocation2] sm:$0xff]
          %v767 = vld [vmem:[#allocation2 + $0x8] sm:$0xff]
          %v768 = vld [vmem:[#allocation2 + $0x10] sm:$0xff]
          %v769 = vld [vmem:[#allocation2 + $0x18] sm:$0xff]
          %v770 = vld [vmem:[#allocation2 + $0x20] sm:$0xff]
          %v771 = vld [vmem:[#allocation2 + $0x28] sm:$0xff]
          %v772 = vld [vmem:[#allocation2 + $0x30] sm:$0xff]
          %v773 = vld [vmem:[#allocation2 + $0x38] sm:$0xff]
          %v774 = vrcp.pop %v766
          %v775 = vrcp.pop %v767
          %v776 = vrcp.pop %v768
          %v777 = vrcp.pop %v769
          %v778 = vrcp.pop %v770
          %v779 = vrcp.pop %v771
          %v780 = vrcp.pop %v772
          %v781 = vrcp.pop %v773
          %783 = vset.pattern.permute.xlu0 32
          %784 = vperm.xlu0 %783, %v774
          %v785 = vpop.permute.xlu0 %784
          %788 = vset.pattern.permute.xlu0 32
          %789 = vperm.xlu0 %788, %v775
          %v790 = vpop.permute.xlu0 %789
          %793 = vset.pattern.permute.xlu0 32
          %794 = vperm.xlu0 %793, %v776
          %v795 = vpop.permute.xlu0 %794
          %798 = vset.pattern.permute.xlu0 32
          %799 = vperm.xlu0 %798, %v777
          %v800 = vpop.permute.xlu0 %799
          %803 = vset.pattern.permute.xlu0 32
          %804 = vperm.xlu0 %803, %v778
          %v805 = vpop.permute.xlu0 %804
          %808 = vset.pattern.permute.xlu0 32
          %809 = vperm.xlu0 %808, %v779
          %v810 = vpop.permute.xlu0 %809
          %813 = vset.pattern.permute.xlu0 32
          %814 = vperm.xlu0 %813, %v780
          %v815 = vpop.permute.xlu0 %814
          %818 = vset.pattern.permute.xlu0 32
          %819 = vperm.xlu0 %818, %v781
          %v820 = vpop.permute.xlu0 %819
          %v822 = vmul.f32 %v766, %v785
          %v823 = vmul.f32 %v767, %v790
          %v824 = vmul.f32 %v768, %v795
          %v825 = vmul.f32 %v769, %v800
          %v826 = vmul.f32 %v770, %v805
          %v827 = vmul.f32 %v771, %v810
          %v828 = vmul.f32 %v772, %v815
          %v829 = vmul.f32 %v773, %v820
          %vm830 = vcmp.gt.f32.partialorder %v822, 0.0
          %vm831 = vcmp.gt.f32.partialorder %v823, 0.0
          %vm832 = vcmp.gt.f32.partialorder %v824, 0.0
          %vm833 = vcmp.gt.f32.partialorder %v825, 0.0
          %vm834 = vcmp.gt.f32.partialorder %v826, 0.0
          %vm835 = vcmp.gt.f32.partialorder %v827, 0.0
          %vm836 = vcmp.gt.f32.partialorder %v828, 0.0
          %vm837 = vcmp.gt.f32.partialorder %v829, 0.0
          %v838 = vmul.f32 %v822, 1.442695
          %v839 = vpow.pop %v838
          %v840 = vmul.f32 %v823, 1.442695
          %v841 = vpow.pop %v840
          %v842 = vmul.f32 %v824, 1.442695
          %v843 = vpow.pop %v842
          %v844 = vmul.f32 %v825, 1.442695
          %v845 = vpow.pop %v844
          %v846 = vmul.f32 %v826, 1.442695
          %v847 = vpow.pop %v846
          %v848 = vmul.f32 %v827, 1.442695
          %v849 = vpow.pop %v848
          %v850 = vmul.f32 %v828, 1.442695
          %v851 = vpow.pop %v850
          %v852 = vmul.f32 %v829, 1.442695
          %v853 = vpow.pop %v852
          %v854 = vsub.f32 %v839, 1.0
          %v855 = vsub.f32 %v841, 1.0
          %v856 = vsub.f32 %v843, 1.0
          %v857 = vsub.f32 %v845, 1.0
          %v858 = vsub.f32 %v847, 1.0
          %v859 = vsub.f32 %v849, 1.0
          %v860 = vsub.f32 %v851, 1.0
          %v861 = vsub.f32 %v853, 1.0
          %v862 = vsel %vm830, %v822, %v854
          %v863 = vsel %vm831, %v823, %v855
          %v864 = vsel %vm832, %v824, %v856
          %v865 = vsel %vm833, %v825, %v857
          %v866 = vsel %vm834, %v826, %v858
          %v867 = vsel %vm835, %v827, %v859
          %v868 = vsel %vm836, %v828, %v860
          %v869 = vsel %vm837, %v829, %v861
          %870 = vst [vmem:[%s280] sm:$0xff] %v862
          %871 = vst [vmem:[%s280 + $0x8] sm:$0xff] %v863
          %872 = vst [vmem:[%s280 + $0x10] sm:$0xff] %v864
          %873 = vst [vmem:[%s280 + $0x18] sm:$0xff] %v865
          %874 = vst [vmem:[%s280 + $0x20] sm:$0xff] %v866
          %875 = vst [vmem:[%s280 + $0x28] sm:$0xff] %v867
          %876 = vst [vmem:[%s280 + $0x30] sm:$0xff] %v868
          %877 = vst [vmem:[%s280 + $0x38] sm:$0xff] %v869
        $region52: #{tpu_custom_call.1} parent=35 // pred_fallthru
          _
        %s878 = sand.u32 %s154, 1
        %s879 = scalar_lea.sflag [#allocation7], %s878
        %s880 = sand.u32 %s154, 1
        %s881 = smul.addr %s880, 64
        %s882 = scalar_lea.vmem [#allocation8], %s881
        // Predicated region
        $region53: #{tpu_custom_call.1} parent=35 // pred_check
          %p883 = pneg %p164
        $region54: #{tpu_custom_call.1} parent=35 // pred_check_branch
          %885 = sbr.rel (%p883) target = $region56
        $region55: #{tpu_custom_call.1} parent=35 // pred_region
          %s886 = smul.u32 8, %s32
          %s888 = ssub.s32 1024, 1024
          %889 = vsyncadd %s879, %s888
          %s890 = smul.addr %s886, 128
          %s891 = scalar_lea.hbm %s5, %s890
          %s892 = sshll.u32 %s882, 4
          %s893 = int_to_ptr.vmem [resolvable:$true] %s892
          %898 = dma.vmem_to_hbm [thread:$0]  %s893, 1024, %s891, %s879, 128, 128, 8
        $region56: #{tpu_custom_call.1} parent=35 // pred_fallthru
          _
      $region36: #{tpu_custom_call.1} parent=5 // pred_fallthru
        _
      %p899 = scmp.le.s32.totalorder 2, %s23
      // Predicated region
      $region57: #{tpu_custom_call.1} parent=5 // pred_check
        %p900 = pneg %p899
      $region58: #{tpu_custom_call.1} parent=5 // pred_check_branch
        %902 = sbr.rel (%p900) target = $region60
      $region59: #{tpu_custom_call.1} parent=5 // pred_region
        %s903 = ssub.s32 %s23, 2
        // Predicated region
        $region61: #{tpu_custom_call.1} parent=59 // pred_check
          %p904 = pneg %p170
        $region62: #{tpu_custom_call.1} parent=59 // pred_check_branch
          %906 = sbr.rel (%p904) target = $region64
        $region63: #{tpu_custom_call.1} parent=59 // pred_region
          %s907 = sand.u32 %s155, 1
          %s908 = scalar_lea.sflag [#allocation7], %s907
          %s909 = sand.u32 %s155, 1
          %s910 = smul.addr %s909, 64
          %s911 = scalar_lea.vmem [#allocation8], %s910
          %912 = dma.done %s908, 1024
        $region64: #{tpu_custom_call.1} parent=59 // pred_fallthru
          _
      $region60: #{tpu_custom_call.1} parent=5 // pred_fallthru
        _
    $region6: #{tpu_custom_call.1} parent=1 // loop_footer
      %s27 = sadd.s32 1, %s23
    $region7: #{tpu_custom_call.1} parent=1 // loop_footer_branch
      %22 = sbr.rel target = $region3
    $region8: #{tpu_custom_call.1} parent=1 // loop_exit
      _
    %913 = vsyncpa [#allocation6], 1
    %s914 = scalar_lea.sflag [#allocation6], 1
    %915 = vsyncpa %s914, 1
    %916 = vsyncpa [#allocation7], 1
    %s917 = scalar_lea.sflag [#allocation7], 1
    %918 = vsyncpa %s917, 1

</llo_original>
